<compile_context>
chip_gen: v6e
topology: v6e:2x2x1
jax: 0.10.0
libtpu: 0.0.40
codegen_flags: <defaults>
</compile_context>

<pallas_src>
import functools

import jax
import jax.numpy as jnp
from jax import lax
from jax.experimental import pallas as pl
from jax.experimental.pallas import tpu as pltpu


def _attention_kernel(x_ref, wqkv_ref, wproj_ref, bproj_ref, o_ref, acc_ref,
                      *, head_block, head_dim, n_valid):
    """One (batch element, head group) per grid step.

    x_ref     : [Np, C]            compute dtype (bf16 or f32)
    wqkv_ref  : [C, Hb*3*D]        this group's QKV weights, columns (h_local, {q,k,v}, D);
                                   Q columns already pre-scaled by head_dim**-0.5
    wproj_ref : [Hb, D, C]         this group's output-projection weights
    bproj_ref : [1, C]             f32 bias
    o_ref     : [Np, C]            output (written on the last head group)
    acc_ref   : [Np, C] f32        resident accumulator across the head-group axis
    """
    g = pl.program_id(1)
    num_g = pl.num_programs(1)
    Hb, D = head_block, head_dim

    x = x_ref[...]                                   # [Np, C], native dtype -> MXU
    Np = x.shape[0]
    dt = x.dtype

    # Initialize the accumulator with the projection bias on the first head group.
    @pl.when(g == 0)
    def _init():
        acc_ref[...] = jnp.broadcast_to(bproj_ref[...].astype(jnp.float32),
                                        acc_ref.shape)

    # One full-width QKV projection for this head group: [Np, C] @ [C, 3*Hb*D].
    qkv = lax.dot_general(x, wqkv_ref[...], (((1,), (0,)), ((), ())),
                          preferred_element_type=jnp.float32)
    qkv = qkv.astype(dt)                             # [Np, Hb*3*D]

    # Key-padding mask (static check; hoisted out of the per-head loop).
    if n_valid < Np:
        key_valid = lax.broadcasted_iota(jnp.int32, (1, Np), 1) < n_valid
    else:
        key_valid = None

    # Short unrolled loop over the heads of this group: only one [Np, Np] score tile is
    # live at a time, and the head-merge is fused into the f32 accumulation below.
    for hl in range(Hb):
        base = hl * 3 * D
        q_h = qkv[:, base:base + D]                  # [Np, D]  (scale pre-folded)
        k_h = qkv[:, base + D:base + 2 * D]          # [Np, D]
        v_h = qkv[:, base + 2 * D:base + 3 * D]      # [Np, D]

        # Scores: [Np, Np] in f32 (q @ k^T).
        s = lax.dot_general(q_h, k_h, (((1,), (1,)), ((), ())),
                            preferred_element_type=jnp.float32)
        if key_valid is not None:
            s = jnp.where(key_valid, s, -1e30)

        # Numerically-stable softmax numerator in f32; normalize AFTER the P.V matmul.
        m = jnp.max(s, axis=-1, keepdims=True)
        e = jnp.exp(s - m)                           # [Np, Np] f32
        r = pl.reciprocal(jnp.sum(e, axis=-1, keepdims=True), approx=True)  # [Np, 1]

        ctx = lax.dot_general(e.astype(dt), v_h, (((1,), (0,)), ((), ())),
                              preferred_element_type=jnp.float32)           # [Np, D]
        ctx = (ctx * r).astype(dt)                   # row-normalize (Np*D, not Np*Np)

        # Output projection with the head-merge fused into the accumulation:
        #   acc[n, c] += sum_d ctx[n, d] * w_proj[h*D + d, c]
        acc_ref[...] += lax.dot_general(ctx, wproj_ref[hl],
                                        (((1,), (0,)), ((), ())),
                                        preferred_element_type=jnp.float32)

    @pl.when(g == num_g - 1)
    def _finalize():
        o_ref[...] = acc_ref[...].astype(o_ref.dtype)


def attention_forward(x, w_qkv, w_proj, b_proj, *, num_heads, head_block=None,
                      compute_dtype=jnp.bfloat16):
    """x: [B, N, C]; w_qkv: [C, 3C]; w_proj: [C, C]; b_proj: [1, C]."""
    B, N, C = x.shape
    H = num_heads
    assert C % H == 0
    D = C // H
    scale = D ** (-0.5)
    out_dtype = x.dtype

    # Head grouping: the head-group grid axis adds pipeline steps and caps the per-step
    # VMEM footprint (relevant on v7x).  Default: two groups when H is even.
    if head_block is None:
        head_block = H // 2 if (H % 2 == 0 and H > 1) else H
    assert H % head_block == 0
    Hb = head_block
    G = H // Hb

    # Sequence padding: 128-lane multiples for large N (lane-dense [Np, Np] score tiles,
    # unmasked stores), sublane multiples of 8 for small N.
    if N > 96:
        Np = -(-N // 128) * 128
    else:
        Np = max(8, -(-N // 8) * 8)
    if Np != N:
        x = jnp.pad(x, ((0, 0), (0, Np - N), (0, 0)))

    # ---- one-time wrapper-side weight prep (free relative to the kernel) ----
    # w_qkv columns are ordered (3, H, D); fold the softmax scale into the Q columns,
    # then regroup to [G, C, Hb*3*D] so each head group is one rank-2 weight block whose
    # columns are ordered (h_local, {q,k,v}, D).
    w = w_qkv.astype(jnp.float32).reshape(C, 3, H, D)
    w = w.at[:, 0].multiply(scale)                        # fold scale into Q (no qkv bias)
    w = w.transpose(2, 0, 1, 3)                           # [H, C, 3, D]
    w = w.reshape(G, Hb, C, 3, D).transpose(0, 2, 1, 3, 4)  # [G, C, Hb, 3, D]
    wqkv_g = w.reshape(G, C, Hb * 3 * D).astype(compute_dtype)

    # w_proj rows are ordered (H, D): [C, C] -> [H, D, C] for per-head [D, C] slices.
    wproj_h = w_proj.astype(jnp.float32).reshape(H, D, C).astype(compute_dtype)

    b_proj_f32 = b_proj.astype(jnp.float32).reshape(1, C)
    x_c = x.astype(compute_dtype)

    kernel = functools.partial(_attention_kernel, head_block=Hb, head_dim=D, n_valid=N)

    out = pl.pallas_call(
        kernel,
        out_shape=jax.ShapeDtypeStruct((B, Np, C), out_dtype),
        grid_spec=pltpu.PrefetchScalarGridSpec(
            num_scalar_prefetch=0,
            grid=(B, G),                                   # reduction (head groups) last
            in_specs=[
                pl.BlockSpec((None, Np, C), lambda b, g: (b, 0, 0)),          # x
                pl.BlockSpec((None, C, Hb * 3 * D), lambda b, g: (g, 0, 0)),  # qkv weights
                pl.BlockSpec((Hb, D, C), lambda b, g: (g, 0, 0)),             # proj weights
                pl.BlockSpec((1, C), lambda b, g: (0, 0)),                    # proj bias
            ],
            out_specs=pl.BlockSpec((None, Np, C), lambda b, g: (b, 0, 0)),
            scratch_shapes=[pltpu.VMEM((Np, C), jnp.float32)],                # accumulator
        ),
        compiler_params=pltpu.CompilerParams(
            dimension_semantics=("parallel", "arbitrary"),
            vmem_limit_bytes=40 * 1024 * 1024,   # per-step footprint is a few MiB; leaves
                                                 # headroom on v7x's 64 MiB VMEM
        ),
    )(x_c, wqkv_g, wproj_h, b_proj_f32)

    return out[:, :N, :] if Np != N else out


def attention_reference(x, w_qkv, w_proj, b_proj, *, num_heads):
    """Pure-JAX reference mirroring the PyTorch forward (f32)."""
    B, N, C = x.shape
    D = C // num_heads
    scale = D ** (-0.5)
    qkv = jnp.einsum('bnc,cd->bnd', x, w_qkv)
    qkv = qkv.reshape(B, N, 3, num_heads, D).transpose(2, 0, 3, 1, 4)
    q, k, v = qkv[0], qkv[1], qkv[2]
    attn = jnp.einsum('bhnd,bhmd->bhnm', q, k) * scale
    attn = jax.nn.softmax(attn, axis=-1)
    out = jnp.einsum('bhnm,bhmd->bhnd', attn, v)
    out = out.transpose(0, 2, 1, 3).reshape(B, N, C)
    return jnp.einsum('bnc,cd->bnd', out, w_proj) + b_proj[0]


if __name__ == "__main__":
    # Small, module-consistent shapes: B=2 batches, C=32 dim, 4 heads (head_dim=8).
    B, C = 2, 32
    num_heads = 4

    key = jax.random.PRNGKey(0)
    kx, kq, kp, kb = jax.random.split(key, 4)

    w_qkv = jax.random.normal(kq, (C, 3 * C), dtype=jnp.float32) * 0.05
    w_proj = jax.random.normal(kp, (C, C), dtype=jnp.float32) * 0.05
    b_proj = jax.random.normal(kb, (1, C), dtype=jnp.float32) * 0.05

    # Case 1: aligned N, f32 compute, two head groups (exercises the accumulator path).
    N = 8
    x = jax.random.normal(kx, (B, N, C), dtype=jnp.float32)
    out = jax.block_until_ready(
        attention_forward(x, w_qkv, w_proj, b_proj, num_heads=num_heads,
                          compute_dtype=jnp.float32))
    ref = attention_reference(x, w_qkv, w_proj, b_proj, num_heads=num_heads)
    assert out.shape == (B, N, C)
    assert jnp.allclose(out, ref, atol=2e-3, rtol=2e-3), (
        "mismatch (aligned N, f32); max abs err = %g" % float(jnp.max(jnp.abs(out - ref))))

    # Case 2: ragged N (pad + key masking), single head group, f32 compute.
    N2 = 7
    x2 = jax.random.normal(kx, (B, N2, C), dtype=jnp.float32)
    out2 = jax.block_until_ready(
        attention_forward(x2, w_qkv, w_proj, b_proj, num_heads=num_heads,
                          head_block=num_heads, compute_dtype=jnp.float32))
    ref2 = attention_reference(x2, w_qkv, w_proj, b_proj, num_heads=num_heads)
    assert out2.shape == (B, N2, C)
    assert jnp.allclose(out2, ref2, atol=2e-3, rtol=2e-3), (
        "mismatch (padded N, f32); max abs err = %g" % float(jnp.max(jnp.abs(out2 - ref2))))

    # Case 3: default bf16 compute path (per review) against the f32 reference.
    out3 = jax.block_until_ready(
        attention_forward(x, w_qkv, w_proj, b_proj, num_heads=num_heads))
    assert out3.shape == (B, N, C)
    assert jnp.allclose(out3, ref, atol=2e-2, rtol=2e-2), (
        "mismatch (bf16); max abs err = %g" % float(jnp.max(jnp.abs(out3 - ref))))

    print("KERNEL_OK")
</pallas_src>

<mosaic_0001>
module attributes {stable_mosaic.version = 11 : i64} {
  func.func @_attention_kernel(%arg0: i32, %arg1: i32, %arg2: memref<1x8x32xf32, #tpu.memory_space<vmem>>, %arg3: memref<1x32x48xf32, #tpu.memory_space<vmem>>, %arg4: memref<2x8x32xf32, #tpu.memory_space<vmem>>, %arg5: memref<1x32xf32, #tpu.memory_space<vmem>>, %arg6: memref<1x8x32xf32, #tpu.memory_space<vmem>>, %arg7: memref<8x32xf32, #tpu.memory_space<vmem>>) attributes {dimension_semantics = [#tpu.dimension_semantics<parallel>, #tpu.dimension_semantics<arbitrary>], iteration_bounds = array<i64: 2, 2>, scalar_prefetch = 0 : i64, scratch_operands = 1 : i64, tpu.core_type = #tpu.core_type<tc>, window_params = [{transform_indices = @transform_0, window_bounds = array<i64: 1, 8, 32>}, {transform_indices = @transform_1, window_bounds = array<i64: 1, 32, 48>}, {transform_indices = @transform_2, window_bounds = array<i64: 2, 8, 32>}, {pipeline_mode = #tpu.pipeline_mode<synchronous>, transform_indices = @transform_3, window_bounds = array<i64: 1, 32>}, {transform_indices = @transform_4, window_bounds = array<i64: 1, 8, 32>}]} {
    %c0 = arith.constant 0 : index
    %c0_0 = arith.constant 0 : index
    %c0_1 = arith.constant 0 : index
    %0 = vector.load %arg2[%c0, %c0_0, %c0_1] : memref<1x8x32xf32, #tpu.memory_space<vmem>>, vector<1x8x32xf32>
    %1 = vector.shape_cast %0 : vector<1x8x32xf32> to vector<8x32xf32>
    %c0_i32 = arith.constant 0 : i32
    %2 = arith.cmpi eq, %arg1, %c0_i32 : i32
    %3 = arith.extui %2 : i1 to i32
    %c0_i32_2 = arith.constant 0 : i32
    %4 = arith.cmpi ne, %3, %c0_i32_2 : i32
    scf.if %4 {
      %c0_30 = arith.constant 0 : index
      %c0_31 = arith.constant 0 : index
      %53 = vector.load %arg5[%c0_30, %c0_31] : memref<1x32xf32, #tpu.memory_space<vmem>>, vector<1x32xf32>
      %54 = vector.shape_cast %53 : vector<1x32xf32> to vector<1x32xf32>
      %55 = vector.broadcast %54 : vector<1x32xf32> to vector<8x32xf32>
      %c0_32 = arith.constant 0 : index
      %c0_33 = arith.constant 0 : index
      %56 = vector.load %arg7[%c0_32, %c0_33] : memref<8x32xf32, #tpu.memory_space<vmem>>, vector<8x32xf32>
      tpu.vector_store %arg7[%c0_32, %c0_33], %55 {strides = array<i32>} : memref<8x32xf32, #tpu.memory_space<vmem>>, vector<8x32xf32>,
    } else {
    }
    %c0_3 = arith.constant 0 : index
    %c0_4 = arith.constant 0 : index
    %c0_5 = arith.constant 0 : index
    %5 = vector.load %arg3[%c0_3, %c0_4, %c0_5] : memref<1x32x48xf32, #tpu.memory_space<vmem>>, vector<1x32x48xf32>
    %6 = vector.shape_cast %5 : vector<1x32x48xf32> to vector<32x48xf32>
    %cst = arith.constant dense<0.000000e+00> : vector<8x48xf32>
    %7 = tpu.matmul %1, %6, %cst {dimension_numbers = #tpu.dot_dimension_numbers<[1], [0], [0], [1], [0, 0, 1, 1], [], []>} : vector<8x32xf32>, vector<32x48xf32>, vector<8x48xf32> -> vector<8x48xf32>
    %8 = vector.extract_strided_slice %7 {offsets = [0, 0], sizes = [8, 8], strides = [1, 1]} : vector<8x48xf32> to vector<8x8xf32>
    %9 = vector.extract_strided_slice %7 {offsets = [0, 8], sizes = [8, 8], strides = [1, 1]} : vector<8x48xf32> to vector<8x8xf32>
    %10 = vector.extract_strided_slice %7 {offsets = [0, 16], sizes = [8, 8], strides = [1, 1]} : vector<8x48xf32> to vector<8x8xf32>
    %cst_6 = arith.constant dense<0.000000e+00> : vector<8x8xf32>
    %11 = tpu.matmul %8, %9, %cst_6 {dimension_numbers = #tpu.dot_dimension_numbers<[1], [1], [0], [0], [0, 0, 1, 0], [], []>} : vector<8x8xf32>, vector<8x8xf32>, vector<8x8xf32> -> vector<8x8xf32>
    %cst_7 = arith.constant dense<0xFF800000> : vector<8xf32>
    %12 = vector.multi_reduction <maximumf>, %11, %cst_7 [1] : vector<8x8xf32> to vector<8xf32>
    %13 = vector.shape_cast %12 : vector<8xf32> to vector<8x1xf32>
    %14 = vector.broadcast %13 : vector<8x1xf32> to vector<8x8xf32>
    %15 = arith.subf %11, %14 : vector<8x8xf32>
    %16 = math.exp %15 : vector<8x8xf32>
    %cst_8 = arith.constant dense<0.000000e+00> : vector<8xf32>
    %17 = vector.multi_reduction <add>, %16, %cst_8 [1] : vector<8x8xf32> to vector<8xf32>
    %18 = vector.shape_cast %17 : vector<8xf32> to vector<8x1xf32>
    %19 = tpu.reciprocal %18 {approx = true} : vector<8x1xf32> -> vector<8x1xf32>
    %cst_9 = arith.constant dense<0.000000e+00> : vector<8x8xf32>
    %20 = tpu.matmul %16, %10, %cst_9 {dimension_numbers = #tpu.dot_dimension_numbers<[1], [0], [0], [1], [0, 0, 1, 1], [], []>} : vector<8x8xf32>, vector<8x8xf32>, vector<8x8xf32> -> vector<8x8xf32>
    %21 = vector.broadcast %19 : vector<8x1xf32> to vector<8x8xf32>
    %22 = arith.mulf %20, %21 : vector<8x8xf32>
    %c0_10 = arith.constant 0 : index
    %c0_11 = arith.constant 0 : index
    %23 = vector.load %arg7[%c0_10, %c0_11] : memref<8x32xf32, #tpu.memory_space<vmem>>, vector<8x32xf32>
    %c0_12 = arith.constant 0 : index
    %c0_13 = arith.constant 0 : index
    %c0_14 = arith.constant 0 : index
    %24 = vector.load %arg4[%c0_12, %c0_13, %c0_14] : memref<2x8x32xf32, #tpu.memory_space<vmem>>, vector<1x8x32xf32>
    %25 = vector.shape_cast %24 : vector<1x8x32xf32> to vector<8x32xf32>
    %cst_15 = arith.constant dense<0.000000e+00> : vector<8x32xf32>
    %26 = tpu.matmul %22, %25, %cst_15 {dimension_numbers = #tpu.dot_dimension_numbers<[1], [0], [0], [1], [0, 0, 1, 1], [], []>} : vector<8x8xf32>, vector<8x32xf32>, vector<8x32xf32> -> vector<8x32xf32>
    %27 = arith.addf %23, %26 : vector<8x32xf32>
    %c0_16 = arith.constant 0 : index
    %c0_17 = arith.constant 0 : index
    %28 = vector.load %arg7[%c0_16, %c0_17] : memref<8x32xf32, #tpu.memory_space<vmem>>, vector<8x32xf32>
    tpu.vector_store %arg7[%c0_16, %c0_17], %27 {strides = array<i32>} : memref<8x32xf32, #tpu.memory_space<vmem>>, vector<8x32xf32>,
    %29 = vector.extract_strided_slice %7 {offsets = [0, 24], sizes = [8, 8], strides = [1, 1]} : vector<8x48xf32> to vector<8x8xf32>
    %30 = vector.extract_strided_slice %7 {offsets = [0, 32], sizes = [8, 8], strides = [1, 1]} : vector<8x48xf32> to vector<8x8xf32>
    %31 = vector.extract_strided_slice %7 {offsets = [0, 40], sizes = [8, 8], strides = [1, 1]} : vector<8x48xf32> to vector<8x8xf32>
    %cst_18 = arith.constant dense<0.000000e+00> : vector<8x8xf32>
    %32 = tpu.matmul %29, %30, %cst_18 {dimension_numbers = #tpu.dot_dimension_numbers<[1], [1], [0], [0], [0, 0, 1, 0], [], []>} : vector<8x8xf32>, vector<8x8xf32>, vector<8x8xf32> -> vector<8x8xf32>
    %cst_19 = arith.constant dense<0xFF800000> : vector<8xf32>
    %33 = vector.multi_reduction <maximumf>, %32, %cst_19 [1] : vector<8x8xf32> to vector<8xf32>
    %34 = vector.shape_cast %33 : vector<8xf32> to vector<8x1xf32>
    %35 = vector.broadcast %34 : vector<8x1xf32> to vector<8x8xf32>
    %36 = arith.subf %32, %35 : vector<8x8xf32>
    %37 = math.exp %36 : vector<8x8xf32>
    %cst_20 = arith.constant dense<0.000000e+00> : vector<8xf32>
    %38 = vector.multi_reduction <add>, %37, %cst_20 [1] : vector<8x8xf32> to vector<8xf32>
    %39 = vector.shape_cast %38 : vector<8xf32> to vector<8x1xf32>
    %40 = tpu.reciprocal %39 {approx = true} : vector<8x1xf32> -> vector<8x1xf32>
    %cst_21 = arith.constant dense<0.000000e+00> : vector<8x8xf32>
    %41 = tpu.matmul %37, %31, %cst_21 {dimension_numbers = #tpu.dot_dimension_numbers<[1], [0], [0], [1], [0, 0, 1, 1], [], []>} : vector<8x8xf32>, vector<8x8xf32>, vector<8x8xf32> -> vector<8x8xf32>
    %42 = vector.broadcast %40 : vector<8x1xf32> to vector<8x8xf32>
    %43 = arith.mulf %41, %42 : vector<8x8xf32>
    %c0_22 = arith.constant 0 : index
    %c0_23 = arith.constant 0 : index
    %44 = vector.load %arg7[%c0_22, %c0_23] : memref<8x32xf32, #tpu.memory_space<vmem>>, vector<8x32xf32>
    %c1 = arith.constant 1 : index
    %c0_24 = arith.constant 0 : index
    %c0_25 = arith.constant 0 : index
    %45 = vector.load %arg4[%c1, %c0_24, %c0_25] : memref<2x8x32xf32, #tpu.memory_space<vmem>>, vector<1x8x32xf32>
    %46 = vector.shape_cast %45 : vector<1x8x32xf32> to vector<8x32xf32>
    %cst_26 = arith.constant dense<0.000000e+00> : vector<8x32xf32>
    %47 = tpu.matmul %43, %46, %cst_26 {dimension_numbers = #tpu.dot_dimension_numbers<[1], [0], [0], [1], [0, 0, 1, 1], [], []>} : vector<8x8xf32>, vector<8x32xf32>, vector<8x32xf32> -> vector<8x32xf32>
    %48 = arith.addf %44, %47 : vector<8x32xf32>
    %c0_27 = arith.constant 0 : index
    %c0_28 = arith.constant 0 : index
    %49 = vector.load %arg7[%c0_27, %c0_28] : memref<8x32xf32, #tpu.memory_space<vmem>>, vector<8x32xf32>
    tpu.vector_store %arg7[%c0_27, %c0_28], %48 {strides = array<i32>} : memref<8x32xf32, #tpu.memory_space<vmem>>, vector<8x32xf32>,
    %c1_i32 = arith.constant 1 : i32
    %50 = arith.cmpi eq, %arg1, %c1_i32 : i32
    %51 = arith.extui %50 : i1 to i32
    %c0_i32_29 = arith.constant 0 : i32
    %52 = arith.cmpi ne, %51, %c0_i32_29 : i32
    scf.if %52 {
      %c0_30 = arith.constant 0 : index
      %c0_31 = arith.constant 0 : index
      %53 = vector.load %arg7[%c0_30, %c0_31] : memref<8x32xf32, #tpu.memory_space<vmem>>, vector<8x32xf32>
      %c0_32 = arith.constant 0 : index
      %c0_33 = arith.constant 0 : index
      %c0_34 = arith.constant 0 : index
      %54 = vector.load %arg6[%c0_32, %c0_33, %c0_34] : memref<1x8x32xf32, #tpu.memory_space<vmem>>, vector<1x8x32xf32>
      %55 = vector.shape_cast %54 : vector<1x8x32xf32> to vector<8x32xf32>
      %56 = vector.shape_cast %53 : vector<8x32xf32> to vector<1x8x32xf32>
      tpu.vector_store %arg6[%c0_32, %c0_33, %c0_34], %56 {strides = array<i32>} : memref<1x8x32xf32, #tpu.memory_space<vmem>>, vector<1x8x32xf32>,
    } else {
    }
    return
  }
  func.func @transform_0(%arg0: i32, %arg1: i32) -> (i32, i32, i32) {
    %c0_i32 = arith.constant 0 : i32
    %c0_i32_0 = arith.constant 0 : i32
    %c0_i32_1 = arith.constant 0 : i32
    return %arg0, %c0_i32, %c0_i32_0 : i32, i32, i32
  }
  func.func @transform_1(%arg0: i32, %arg1: i32) -> (i32, i32, i32) {
    %c0_i32 = arith.constant 0 : i32
    %c0_i32_0 = arith.constant 0 : i32
    %c0_i32_1 = arith.constant 0 : i32
    return %arg1, %c0_i32, %c0_i32_0 : i32, i32, i32
  }
  func.func @transform_2(%arg0: i32, %arg1: i32) -> (i32, i32, i32) {
    %c0_i32 = arith.constant 0 : i32
    %c0_i32_0 = arith.constant 0 : i32
    %c0_i32_1 = arith.constant 0 : i32
    return %arg1, %c0_i32, %c0_i32_0 : i32, i32, i32
  }
  func.func @transform_3(%arg0: i32, %arg1: i32) -> (i32, i32) {
    %c0_i32 = arith.constant 0 : i32
    %c0_i32_0 = arith.constant 0 : i32
    %c0_i32_1 = arith.constant 0 : i32
    return %c0_i32, %c0_i32_0 : i32, i32
  }
  func.func @transform_4(%arg0: i32, %arg1: i32) -> (i32, i32, i32) {
    %c0_i32 = arith.constant 0 : i32
    %c0_i32_0 = arith.constant 0 : i32
    %c0_i32_1 = arith.constant 0 : i32
    return %arg0, %c0_i32, %c0_i32_0 : i32, i32, i32
  }
}

</mosaic_0001>

<llo_original>
// kernel: tpu_custom_call.1
$region0: #{tpu_custom_call.1}
  #allocation0 [shape = 'u32[]', space=smem, size = 0x4, offset = 0x4, fixed_abs, tag = 'smem constant byte address 0x4 - core index']
  #allocation1 [shape = 'u32[144,128]{1,0:T(1,128)}', space=vmem, size = 0x12000, scoped, tag = 'internal scratch']
  #allocation2 [shape = 'f32[8,32]{1,0:T(8,128)}', space=vmem, size = 0x1000, scoped, tag = 'scratch operand']
  %s0 = inlined_call_operand.hbm [shape: f32[2,8,32], index: 0, kind: input, shape index: {}]
  %s1 = inlined_call_operand.hbm [shape: f32[2,32,48], index: 1, kind: input, shape index: {}]
  %s2 = inlined_call_operand.hbm [shape: f32[4,8,32], index: 2, kind: input, shape index: {}]
  %s3 = inlined_call_operand.vmem [shape: f32[1,32], index: 3, kind: input, shape index: {}]
  %s4 = inlined_call_operand.hbm [shape: f32[2,8,32], index: 4, kind: output, shape index: {}]
  %s5 = sld [smem:[#allocation0]]
  $region69: #{tpu_custom_call.1} parent=0
    _
  %s7 = ssub.s32 1, %s5
  %s8 = scalar_select 0, %s7, %s5
  $region1: #{tpu_custom_call.1} parent=0
    #allocation3 [shape = 'u8[8192]{0}', space=vmem, size = 0x2000, scoped, tag = 'input window, operand 0']
    #allocation4 [shape = 's32[2]{0}', space=sflag, size = 0x8, scoped, tag = 'scoped memory for tpu_custom_call.1']
    #allocation5 [shape = 's32[2]{0}', space=sflag, size = 0x8, scoped, tag = 'scoped memory for tpu_custom_call.1']
    #allocation6 [shape = 'u8[32768]{0}', space=vmem, size = 0x8000, scoped, tag = 'input window, operand 1']
    #allocation7 [shape = 's32[2]{0}', space=sflag, size = 0x8, scoped, tag = 'scoped memory for tpu_custom_call.1']
    #allocation8 [shape = 'u8[16384]{0}', space=vmem, size = 0x4000, scoped, tag = 'input window, operand 2']
    #allocation9 [shape = 'u8[8192]{0}', space=vmem, size = 0x2000, scoped, tag = 'output window, operand 0']
    %9 = vsyncpa [#allocation4], 0
    %s10 = scalar_lea.sflag [#allocation4], 1
    %11 = vsyncpa %s10, 0
    %12 = vsyncpa [#allocation7], 0
    %s13 = scalar_lea.sflag [#allocation7], 1
    %14 = vsyncpa %s13, 0
    %15 = vsyncpa [#allocation5], 0
    %s16 = scalar_lea.sflag [#allocation5], 1
    %17 = vsyncpa %s16, 0
    loop: start=0, step=1, limit=6
    $region2: #{tpu_custom_call.1} parent=1 // loop_pre_header
      _
    $region3: #{tpu_custom_call.1} parent=1 // loop_header
      %s19 = sphi 0, %s23
      %p20 = scmp.ge.s32.totalorder %s19, 6
      %s26 = sphi 0, %s38
      %s27 = sphi 0, %s34
      %s28 = sphi 0, %s26
      %s29 = sphi 0, %s27
      %s30 = sphi 0, %s28
      %s31 = sphi 0, %s29
      %s41 = sphi 0, %s43
      %s44 = sphi 0, %s41
      %s45 = sphi 0, %s44
      %s61 = sphi 0, %s45
      %s67 = sphi 0, %s69
      %s70 = sphi 0, %s67
      %s71 = sphi 0, %s70
      %s87 = sphi 0, %s71
      %s93 = sphi 0, %s95
      %s96 = sphi 0, %s93
      %s97 = sphi 0, %s96
      %s113 = sphi 0, %s97
      %s117 = sphi 0, %s117
      %s119 = sphi 0, %s117
      %s120 = sphi 0, %s119
      %s134 = sphi 0, %s120
      %s140 = sphi 0, %s142
      %s143 = sphi 0, %s140
      %s144 = sphi 0, %s143
      %s160 = sphi 0, %s144
    $region4: #{tpu_custom_call.1} parent=1 // loop_header_branch
      %22 = sbr.rel (%p20) target = $region8
    $region5: #{tpu_custom_call.1} parent=1 // loop_body
      %s24 = ssub.s32 %s19, 1
      %s25 = ssub.s32 %s19, 2
      %s32 = sadd.s32 1, %s27
      %p33 = scmp.ge.s32.totalorder %s32, 2
      %s34 = scalar_select %p33, 0, %s32
      %s35 = sadd.s32 1, %s26
      %s36 = scalar_select %p33, %s35, %s26
      %p37 = scmp.ge.s32.totalorder %s36, 2
      %s38 = scalar_select %p37, 0, %s36
      %s39 = ssub.s32 %s26, %s38
      %p40 = scmp.eq.s32.totalorder %s39, 0
      %s42 = sadd.s32 %s41, 1
      %s43 = scalar_select %p40, %s41, %s42
      %p46 = pneg %p40
      %p47 = scmp.eq.s32.totalorder %s19, 3
      %p48 = por %p46, %p47
      %p49 = scmp.ne.s32.totalorder %s41, %s44
      %p50 = scmp.eq.s32.totalorder %s19, 0
      %p51 = por %p49, %p50
      %p52 = scmp.ne.s32.totalorder %s41, %s44
      %p53 = scmp.eq.s32.totalorder %s24, 3
      %p54 = por %p52, %p53
      %p55 = scmp.ne.s32.totalorder %s44, %s45
      %p56 = scmp.eq.s32.totalorder %s24, 0
      %p57 = por %p55, %p56
      %p58 = scmp.ne.s32.totalorder %s44, %s45
      %p59 = scmp.eq.s32.totalorder %s25, 3
      %p60 = por %p58, %p59
      %p62 = scmp.ne.s32.totalorder %s45, %s61
      %p63 = scmp.eq.s32.totalorder %s25, 0
      %p64 = por %p62, %p63
      %s65 = ssub.s32 %s27, %s34
      %p66 = scmp.eq.s32.totalorder %s65, 0
      %s68 = sadd.s32 %s67, 1
      %s69 = scalar_select %p66, %s67, %s68
      %p72 = pneg %p66
      %p73 = scmp.eq.s32.totalorder %s19, 3
      %p74 = por %p72, %p73
      %p75 = scmp.ne.s32.totalorder %s67, %s70
      %p76 = scmp.eq.s32.totalorder %s19, 0
      %p77 = por %p75, %p76
      %p78 = scmp.ne.s32.totalorder %s67, %s70
      %p79 = scmp.eq.s32.totalorder %s24, 3
      %p80 = por %p78, %p79
      %p81 = scmp.ne.s32.totalorder %s70, %s71
      %p82 = scmp.eq.s32.totalorder %s24, 0
      %p83 = por %p81, %p82
      %p84 = scmp.ne.s32.totalorder %s70, %s71
      %p85 = scmp.eq.s32.totalorder %s25, 3
      %p86 = por %p84, %p85
      %p88 = scmp.ne.s32.totalorder %s71, %s87
      %p89 = scmp.eq.s32.totalorder %s25, 0
      %p90 = por %p88, %p89
      %s91 = ssub.s32 %s27, %s34
      %p92 = scmp.eq.s32.totalorder %s91, 0
      %s94 = sadd.s32 %s93, 1
      %s95 = scalar_select %p92, %s93, %s94
      %p98 = pneg %p92
      %p99 = scmp.eq.s32.totalorder %s19, 3
      %p100 = por %p98, %p99
      %p101 = scmp.ne.s32.totalorder %s93, %s96
      %p102 = scmp.eq.s32.totalorder %s19, 0
      %p103 = por %p101, %p102
      %p104 = scmp.ne.s32.totalorder %s93, %s96
      %p105 = scmp.eq.s32.totalorder %s24, 3
      %p106 = por %p104, %p105
      %p107 = scmp.ne.s32.totalorder %s96, %s97
      %p108 = scmp.eq.s32.totalorder %s24, 0
      %p109 = por %p107, %p108
      %p110 = scmp.ne.s32.totalorder %s96, %s97
      %p111 = scmp.eq.s32.totalorder %s25, 3
      %p112 = por %p110, %p111
      %p114 = scmp.ne.s32.totalorder %s97, %s113
      %p115 = scmp.eq.s32.totalorder %s25, 0
      %p116 = por %p114, %p115
      %s118 = sadd.s32 %s117, 1
      %p121 = scmp.eq.s32.totalorder %s19, 3
      %p122 = scmp.ne.s32.totalorder %s117, %s119
      %p123 = scmp.eq.s32.totalorder %s19, 0
      %p124 = por %p122, %p123
      %p125 = scmp.ne.s32.totalorder %s117, %s119
      %p126 = scmp.eq.s32.totalorder %s24, 3
      %p127 = por %p125, %p126
      %p128 = scmp.ne.s32.totalorder %s119, %s120
      %p129 = scmp.eq.s32.totalorder %s24, 0
      %p130 = por %p128, %p129
      %p131 = scmp.ne.s32.totalorder %s119, %s120
      %p132 = scmp.eq.s32.totalorder %s25, 3
      %p133 = por %p131, %p132
      %p135 = scmp.ne.s32.totalorder %s120, %s134
      %p136 = scmp.eq.s32.totalorder %s25, 0
      %p137 = por %p135, %p136
      %s138 = ssub.s32 %s26, %s38
      %p139 = scmp.eq.s32.totalorder %s138, 0
      %s141 = sadd.s32 %s140, 1
      %s142 = scalar_select %p139, %s140, %s141
      %p145 = pneg %p139
      %p146 = scmp.eq.s32.totalorder %s19, 3
      %p147 = por %p145, %p146
      %p148 = scmp.ne.s32.totalorder %s140, %s143
      %p149 = scmp.eq.s32.totalorder %s19, 0
      %p150 = por %p148, %p149
      %p151 = scmp.ne.s32.totalorder %s140, %s143
      %p152 = scmp.eq.s32.totalorder %s24, 3
      %p153 = por %p151, %p152
      %p154 = scmp.ne.s32.totalorder %s143, %s144
      %p155 = scmp.eq.s32.totalorder %s24, 0
      %p156 = por %p154, %p155
      %p157 = scmp.ne.s32.totalorder %s143, %s144
      %p158 = scmp.eq.s32.totalorder %s25, 3
      %p159 = por %p157, %p158
      %p161 = scmp.ne.s32.totalorder %s144, %s160
      %p162 = scmp.eq.s32.totalorder %s25, 0
      %p163 = por %p161, %p162
      %p164 = scmp.le.s32.totalorder 1, %s19
      %p165 = scmp.lt.s32.totalorder %s19, 5
      %p166 = pnand %p164, %p165
      %p167 = pneg %p166
      // Predicated region
      $region9: #{tpu_custom_call.1} parent=5 // pred_check
        _
      $region10: #{tpu_custom_call.1} parent=5 // pred_check_branch
        %169 = sbr.rel (%p166) target = $region12
      $region11: #{tpu_custom_call.1} parent=5 // pred_region
        %s170 = ssub.s32 %s19, 1
        // Predicated region
        $region13: #{tpu_custom_call.1} parent=11 // pred_check
          %p171 = pneg %p130
        $region14: #{tpu_custom_call.1} parent=11 // pred_check_branch
          %173 = sbr.rel (%p171) target = $region16
        $region15: #{tpu_custom_call.1} parent=11 // pred_region
          _
        $region16: #{tpu_custom_call.1} parent=11 // pred_fallthru
          _
      $region12: #{tpu_custom_call.1} parent=5 // pred_fallthru
        _
      %p174 = scmp.lt.s32.totalorder %s19, 4
      // Predicated region
      $region17: #{tpu_custom_call.1} parent=5 // pred_check
        %p175 = pneg %p174
      $region18: #{tpu_custom_call.1} parent=5 // pred_check_branch
        %177 = sbr.rel (%p175) target = $region20
      $region19: #{tpu_custom_call.1} parent=5 // pred_region
        // Predicated region
        $region21: #{tpu_custom_call.1} parent=19 // pred_check
          %p178 = pneg %p51
        $region22: #{tpu_custom_call.1} parent=19 // pred_check_branch
          %180 = sbr.rel (%p178) target = $region24
        $region23: #{tpu_custom_call.1} parent=19 // pred_region
          %s181 = sand.u32 %s41, 1
          %s182 = scalar_lea.sflag [#allocation4], %s181
          %s183 = sand.u32 %s41, 1
          %s184 = smul.addr %s183, 8
          %s185 = scalar_lea.vmem [#allocation3], %s184
          %s187 = ssub.s32 128, 128
          %188 = vsyncadd %s182, %s187
          %s189 = smul.addr %s26, 128
          %s190 = scalar_lea.hbm %s0, %s189
          %s192 = sshll.u32 %s185, 4
          %s193 = int_to_ptr.vmem [resolvable:$true] %s192
          %195 = dma.hbm_to_vmem [thread:$0]  %s190, 128, %s193, %s182
        $region24: #{tpu_custom_call.1} parent=19 // pred_fallthru
          _
        // Predicated region
        $region25: #{tpu_custom_call.1} parent=19 // pred_check
          %p196 = pneg %p77
        $region26: #{tpu_custom_call.1} parent=19 // pred_check_branch
          %198 = sbr.rel (%p196) target = $region28
        $region27: #{tpu_custom_call.1} parent=19 // pred_region
          %s199 = sand.u32 %s19, 1
          %s200 = scalar_lea.sflag [#allocation7], %s199
          %s201 = sand.u32 %s67, 1
          %s202 = smul.addr %s201, 32
          %s203 = scalar_lea.vmem [#allocation6], %s202
          %s205 = ssub.s32 512, 512
          %206 = vsyncadd %s200, %s205
          %s207 = smul.addr %s27, 4
          %s208 = smul.addr %s207, 128
          %s209 = scalar_lea.hbm %s1, %s208
          %s210 = sshll.u32 %s203, 4
          %s211 = int_to_ptr.vmem [resolvable:$true] %s210
          %216 = dma.hbm_to_vmem [thread:$0]  %s209, 512, %s211, %s200, 128, 128, 8
        $region28: #{tpu_custom_call.1} parent=19 // pred_fallthru
          _
        // Predicated region
        $region29: #{tpu_custom_call.1} parent=19 // pred_check
          %p217 = pneg %p103
        $region30: #{tpu_custom_call.1} parent=19 // pred_check_branch
          %219 = sbr.rel (%p217) target = $region32
        $region31: #{tpu_custom_call.1} parent=19 // pred_region
          %s220 = sand.u32 %s19, 1
          %s221 = scalar_lea.sflag [#allocation7], %s220
          %s222 = sand.u32 %s93, 1
          %s223 = smul.addr %s222, 16
          %s224 = scalar_lea.vmem [#allocation8], %s223
          %s225 = smul.u32 2, %s27
          %s227 = ssub.s32 256, 256
          %228 = vsyncadd %s221, %s227
          %s229 = smul.addr %s225, 128
          %s230 = scalar_lea.hbm %s2, %s229
          %s231 = sshll.u32 %s224, 4
          %s232 = int_to_ptr.vmem [resolvable:$true] %s231
          %237 = dma.hbm_to_vmem [thread:$0]  %s230, 256, %s232, %s221, 128, 128, 8
        $region32: #{tpu_custom_call.1} parent=19 // pred_fallthru
          _
      $region20: #{tpu_custom_call.1} parent=5 // pred_fallthru
        _
      %p238 = scmp.le.s32.totalorder 1, %s19
      %p239 = scmp.lt.s32.totalorder %s19, 5
      %p240 = pnand %p238, %p239
      %p241 = pneg %p240
      // Predicated region
      $region33: #{tpu_custom_call.1} parent=5 // pred_check
        _
      $region34: #{tpu_custom_call.1} parent=5 // pred_check_branch
        %243 = sbr.rel (%p240) target = $region36
      $region35: #{tpu_custom_call.1} parent=5 // pred_region
        %s244 = ssub.s32 %s19, 1
        %s245 = sand.u32 %s44, 1
        %s246 = scalar_lea.sflag [#allocation4], %s245
        %s247 = sand.u32 %s44, 1
        %s248 = smul.addr %s247, 8
        %s249 = scalar_lea.vmem [#allocation3], %s248
        // Predicated region
        $region37: #{tpu_custom_call.1} parent=35 // pred_check
          %p250 = pneg %p57
        $region38: #{tpu_custom_call.1} parent=35 // pred_check_branch
          %252 = sbr.rel (%p250) target = $region40
        $region39: #{tpu_custom_call.1} parent=35 // pred_region
          %253 = dma.done %s246, 128
        $region40: #{tpu_custom_call.1} parent=35 // pred_fallthru
          _
        %s254 = sand.u32 %s24, 1
        %s255 = scalar_lea.sflag [#allocation7], %s254
        %s256 = sand.u32 %s70, 1
        %s257 = smul.addr %s256, 32
        %s258 = scalar_lea.vmem [#allocation6], %s257
        // Predicated region
        $region41: #{tpu_custom_call.1} parent=35 // pred_check
          %p259 = pneg %p83
        $region42: #{tpu_custom_call.1} parent=35 // pred_check_branch
          %261 = sbr.rel (%p259) target = $region44
        $region43: #{tpu_custom_call.1} parent=35 // pred_region
          %262 = dma.done %s255, 512
        $region44: #{tpu_custom_call.1} parent=35 // pred_fallthru
          _
        %s263 = sand.u32 %s24, 1
        %s264 = scalar_lea.sflag [#allocation7], %s263
        %s265 = sand.u32 %s96, 1
        %s266 = smul.addr %s265, 16
        %s267 = scalar_lea.vmem [#allocation8], %s266
        // Predicated region
        $region45: #{tpu_custom_call.1} parent=35 // pred_check
          %p268 = pneg %p109
        $region46: #{tpu_custom_call.1} parent=35 // pred_check_branch
          %270 = sbr.rel (%p268) target = $region48
        $region47: #{tpu_custom_call.1} parent=35 // pred_region
          %271 = dma.done %s264, 256
        $region48: #{tpu_custom_call.1} parent=35 // pred_fallthru
          _
        %s272 = sand.u32 %s44, 1
        %s273 = scalar_lea.sflag [#allocation4], %s272
        %s274 = sand.u32 %s44, 1
        %s275 = smul.addr %s274, 8
        %s276 = scalar_lea.vmem [#allocation3], %s275
        %p277 = pneg %p57
        %p278 = pneg %p54
        %s279 = sand.u32 %s24, 1
        %s280 = scalar_lea.sflag [#allocation7], %s279
        %s281 = sand.u32 %s70, 1
        %s282 = smul.addr %s281, 32
        %s283 = scalar_lea.vmem [#allocation6], %s282
        %p284 = pneg %p83
        %p285 = pneg %p80
        %s286 = sand.u32 %s24, 1
        %s287 = scalar_lea.sflag [#allocation7], %s286
        %s288 = sand.u32 %s96, 1
        %s289 = smul.addr %s288, 16
        %s290 = scalar_lea.vmem [#allocation8], %s289
        %p291 = pneg %p109
        %p292 = pneg %p106
        %p293 = pneg %p130
        %p294 = pneg %p127
        %p295 = pneg %p156
        %p296 = pneg %p153
        %s297 = sand.u32 %s143, 1
        %s298 = scalar_lea.sflag [#allocation5], %s297
        %s299 = sand.u32 %s143, 1
        %s300 = smul.addr %s299, 8
        %s301 = scalar_lea.vmem [#allocation9], %s300
        %s302 = smul.u32 2, %s29
        %v303 = vld [vmem:[%s249] sm:$0xff]
        %p304 = scmp.eq.s32.totalorder %s29, 0
        // Predicated region
        $region49: #{tpu_custom_call.1} parent=35 // pred_check
          %p305 = pneg %p304
        $region50: #{tpu_custom_call.1} parent=35 // pred_check_branch
          %307 = sbr.rel (%p305) target = $region52
        $region51: #{tpu_custom_call.1} parent=35 // pred_region
          %v308 = vld [vmem:[%s3] sm:$0x1]
          %v310 = vlaneseq
          %v311 = vshrl.u32 %v310, 7
          %v312 = vsub.s32 0, %v311
          %v313 = vrot.slane %v308, %v312
          %vm315 = vcmask 261120
          %316 = vst.msk [vmem:[#allocation2] sm:$0xff] %vm315, %v313
        $region52: #{tpu_custom_call.1} parent=35 // pred_fallthru
          _
        %v317 = vld [vmem:[%s258] sm:$0xff]
        %v318 = vld [vmem:[%s258 + $0x8] sm:$0xff]
        %v319 = vld [vmem:[%s258 + $0x10] sm:$0xff]
        %v320 = vld [vmem:[%s258 + $0x18] sm:$0xff]
        %vm321 = vcmask 261120
        %v323 = vsel %vm321, %v303, 0
        %325 = vmatprep.subr.mxu0 0.0
        %326 = vmatpush1.msra.mxu0 0.0
        %327 = vmatprep.subr.mxu0 0.0
        %328 = vmatpush1.msra.mxu0 0.0
        %329 = vmatprep.subr.mxu0 0.0
        %330 = vmatpush1.msra.mxu0 0.0
        %331 = vmatprep.subr.mxu0 0.0
        %332 = vmatpush1.msra.mxu0 0.0
        %333 = vmatprep.subr.mxu0 0.0
        %334 = vmatpush1.msra.mxu0 0.0
        %335 = vmatprep.subr.mxu0 0.0
        %336 = vmatpush1.msra.mxu0 0.0
        %337 = vmatprep.subr.mxu0 0.0
        %338 = vmatpush1.msra.mxu0 0.0
        %339 = vmatprep.subr.mxu0 0.0
        %340 = vmatpush1.msra.mxu0 0.0
        %341 = vmatprep.subr.mxu0 0.0
        %342 = vmatpush1.msra.mxu0 0.0
        %343 = vmatprep.subr.mxu0 0.0
        %344 = vmatpush1.msra.mxu0 0.0
        %345 = vmatprep.subr.mxu0 0.0
        %346 = vmatpush1.msra.mxu0 0.0
        %347 = vmatprep.subr.mxu0 0.0
        %348 = vmatpush1.msra.mxu0 0.0
        %349 = vmatprep.subr.mxu0 0.0
        %350 = vmatpush1.msra.mxu0 %v320
        %351 = vmatprep.subr.mxu0 0.0
        %352 = vmatpush1.msra.mxu0 %v319
        %353 = vmatprep.subr.mxu0 0.0
        %354 = vmatpush1.msra.mxu0 %v318
        %355 = vmatprep.subr.mxu0 0.0
        %356 = vmatpush1.msra.mxu0 %v317
        %357 = vmatprep.subr.mxu0 0.0
        %358 = vmatpush2.msra.mxu0 0.0
        %359 = vmatprep.subr.mxu0 0.0
        %360 = vmatpush2.msra.mxu0 0.0
        %361 = vmatprep.subr.mxu0 0.0
        %362 = vmatpush2.msra.mxu0 0.0
        %363 = vmatprep.subr.mxu0 0.0
        %364 = vmatpush2.msra.mxu0 0.0
        %365 = vmatprep.subr.mxu0 0.0
        %366 = vmatpush2.msra.mxu0 0.0
        %367 = vmatprep.subr.mxu0 0.0
        %368 = vmatpush2.msra.mxu0 0.0
        %369 = vmatprep.subr.mxu0 0.0
        %370 = vmatpush2.msra.mxu0 0.0
        %371 = vmatprep.subr.mxu0 0.0
        %372 = vmatpush2.msra.mxu0 0.0
        %373 = vmatprep.subr.mxu0 0.0
        %374 = vmatpush2.msra.mxu0 0.0
        %375 = vmatprep.subr.mxu0 0.0
        %376 = vmatpush2.msra.mxu0 0.0
        %377 = vmatprep.subr.mxu0 0.0
        %378 = vmatpush2.msra.mxu0 0.0
        %379 = vmatprep.subr.mxu0 0.0
        %380 = vmatpush2.msra.mxu0 0.0
        %381 = vmatprep.subr.mxu0 0.0
        %382 = vmatpush2.msra.mxu0 0.0
        %383 = vmatprep.subr.mxu0 0.0
        %384 = vmatpush2.msra.mxu0 0.0
        %385 = vmatprep.subr.mxu0 0.0
        %386 = vmatpush2.msra.mxu0 0.0
        %387 = vmatprep.subr.mxu0 0.0
        %388 = vmatpush2.msra.mxu0 0.0
        %389 = vmatprep.mubr.f32.mxu0 0.0
        %390 = vmatmul.mubr.f32.gmra.mxu0 %v323
        %v391 = vpop.f32.mrf.mxu0
        %v392 = vadd.f32 0.0, %v391
        %v393 = vpop.f32.mrf.mxu0
        %394 = vdwg.mxu0
        %396 = vrot.lane.b32.xlu0 %v392, 120
        %v397 = vpop.permute.xlu0 %396
        %vm398 = vcmask 64512
        %v399 = vsel %vm398, %v392, 0
        %v401 = vsel %vm398, %v397, 0
        %403 = vmatprep.subr.mxu0 0.0
        %404 = vmatpush1.xpose.msra.mxu0 0.0
        %405 = vmatprep.subr.mxu0 0.0
        %406 = vmatpush1.xpose.msra.mxu0 0.0
        %407 = vmatprep.subr.mxu0 0.0
        %408 = vmatpush1.xpose.msra.mxu0 0.0
        %409 = vmatprep.subr.mxu0 0.0
        %410 = vmatpush1.xpose.msra.mxu0 0.0
        %411 = vmatprep.subr.mxu0 0.0
        %412 = vmatpush1.xpose.msra.mxu0 0.0
        %413 = vmatprep.subr.mxu0 0.0
        %414 = vmatpush1.xpose.msra.mxu0 0.0
        %415 = vmatprep.subr.mxu0 0.0
        %416 = vmatpush1.xpose.msra.mxu0 0.0
        %417 = vmatprep.subr.mxu0 0.0
        %418 = vmatpush1.xpose.msra.mxu0 0.0
        %419 = vmatprep.subr.mxu0 0.0
        %420 = vmatpush1.xpose.msra.mxu0 0.0
        %421 = vmatprep.subr.mxu0 0.0
        %422 = vmatpush1.xpose.msra.mxu0 0.0
        %423 = vmatprep.subr.mxu0 0.0
        %424 = vmatpush1.xpose.msra.mxu0 0.0
        %425 = vmatprep.subr.mxu0 0.0
        %426 = vmatpush1.xpose.msra.mxu0 0.0
        %427 = vmatprep.subr.mxu0 0.0
        %428 = vmatpush1.xpose.msra.mxu0 0.0
        %429 = vmatprep.subr.mxu0 0.0
        %430 = vmatpush1.xpose.msra.mxu0 0.0
        %431 = vmatprep.subr.mxu0 0.0
        %432 = vmatpush1.xpose.msra.mxu0 0.0
        %433 = vmatprep.subr.mxu0 0.0
        %434 = vmatpush1.xpose.msra.mxu0 %v401
        %435 = vmatprep.subr.mxu0 0.0
        %436 = vmatpush2.xpose.msra.mxu0 0.0
        %437 = vmatprep.subr.mxu0 0.0
        %438 = vmatpush2.xpose.msra.mxu0 0.0
        %439 = vmatprep.subr.mxu0 0.0
        %440 = vmatpush2.xpose.msra.mxu0 0.0
        %441 = vmatprep.subr.mxu0 0.0
        %442 = vmatpush2.xpose.msra.mxu0 0.0
        %443 = vmatprep.subr.mxu0 0.0
        %444 = vmatpush2.xpose.msra.mxu0 0.0
        %445 = vmatprep.subr.mxu0 0.0
        %446 = vmatpush2.xpose.msra.mxu0 0.0
        %447 = vmatprep.subr.mxu0 0.0
        %448 = vmatpush2.xpose.msra.mxu0 0.0
        %449 = vmatprep.subr.mxu0 0.0
        %450 = vmatpush2.xpose.msra.mxu0 0.0
        %451 = vmatprep.subr.mxu0 0.0
        %452 = vmatpush2.xpose.msra.mxu0 0.0
        %453 = vmatprep.subr.mxu0 0.0
        %454 = vmatpush2.xpose.msra.mxu0 0.0
        %455 = vmatprep.subr.mxu0 0.0
        %456 = vmatpush2.xpose.msra.mxu0 0.0
        %457 = vmatprep.subr.mxu0 0.0
        %458 = vmatpush2.xpose.msra.mxu0 0.0
        %459 = vmatprep.subr.mxu0 0.0
        %460 = vmatpush2.xpose.msra.mxu0 0.0
        %461 = vmatprep.subr.mxu0 0.0
        %462 = vmatpush2.xpose.msra.mxu0 0.0
        %463 = vmatprep.subr.mxu0 0.0
        %464 = vmatpush2.xpose.msra.mxu0 0.0
        %465 = vmatprep.subr.mxu0 0.0
        %466 = vmatpush2.xpose.msra.mxu0 0.0
        %467 = vmatprep.mubr.f32.mxu0 0.0
        %468 = vmatmul.mubr.f32.gmra.mxu0 %v399
        %v469 = vpop.f32.mrf.mxu0
        %v470 = vadd.f32 0.0, %v469
        %v471 = vpop.f32.mrf.mxu0
        %472 = vdwg.mxu0
        %v473 = vsel %vm398, %v470, -inf
        %474 = vmax.xlane.f32.xlu0 %v473
        %v475 = vpop.xlane.xlu0 %474
        %v476 = vsub.f32 %v470, %v475
        %v477 = vmul.f32 %v476, 1.442695
        %v478 = vpow.pop %v477
        %v479 = vsel %vm398, %v478, 0.0
        %480 = vadd.xlane.f32.xlu0 %v479
        %v481 = vpop.xlane.xlu0 %480
        %v482 = vrcp.pop %v481
        %483 = vrot.lane.b32.xlu0 %v392, 112
        %v484 = vpop.permute.xlu0 %483
        %v487 = vsel %vm398, %v478, 0
        %489 = vmatprep.subr.mxu0 0.0
        %490 = vmatpush1.msra.mxu0 0.0
        %491 = vmatprep.subr.mxu0 0.0
        %492 = vmatpush1.msra.mxu0 0.0
        %493 = vmatprep.subr.mxu0 0.0
        %494 = vmatpush1.msra.mxu0 0.0
        %495 = vmatprep.subr.mxu0 0.0
        %496 = vmatpush1.msra.mxu0 0.0
        %497 = vmatprep.subr.mxu0 0.0
        %498 = vmatpush1.msra.mxu0 0.0
        %499 = vmatprep.subr.mxu0 0.0
        %500 = vmatpush1.msra.mxu0 0.0
        %501 = vmatprep.subr.mxu0 0.0
        %502 = vmatpush1.msra.mxu0 0.0
        %503 = vmatprep.subr.mxu0 0.0
        %504 = vmatpush1.msra.mxu0 0.0
        %505 = vmatprep.subr.mxu0 0.0
        %506 = vmatpush1.msra.mxu0 0.0
        %507 = vmatprep.subr.mxu0 0.0
        %508 = vmatpush1.msra.mxu0 0.0
        %509 = vmatprep.subr.mxu0 0.0
        %510 = vmatpush1.msra.mxu0 0.0
        %511 = vmatprep.subr.mxu0 0.0
        %512 = vmatpush1.msra.mxu0 0.0
        %513 = vmatprep.subr.mxu0 0.0
        %514 = vmatpush1.msra.mxu0 0.0
        %515 = vmatprep.subr.mxu0 0.0
        %516 = vmatpush1.msra.mxu0 0.0
        %517 = vmatprep.subr.mxu0 0.0
        %518 = vmatpush1.msra.mxu0 0.0
        %519 = vmatprep.subr.mxu0 0.0
        %520 = vmatpush1.msra.mxu0 %v484
        %521 = vmatprep.subr.mxu0 0.0
        %522 = vmatpush2.msra.mxu0 0.0
        %523 = vmatprep.subr.mxu0 0.0
        %524 = vmatpush2.msra.mxu0 0.0
        %525 = vmatprep.subr.mxu0 0.0
        %526 = vmatpush2.msra.mxu0 0.0
        %527 = vmatprep.subr.mxu0 0.0
        %528 = vmatpush2.msra.mxu0 0.0
        %529 = vmatprep.subr.mxu0 0.0
        %530 = vmatpush2.msra.mxu0 0.0
        %531 = vmatprep.subr.mxu0 0.0
        %532 = vmatpush2.msra.mxu0 0.0
        %533 = vmatprep.subr.mxu0 0.0
        %534 = vmatpush2.msra.mxu0 0.0
        %535 = vmatprep.subr.mxu0 0.0
        %536 = vmatpush2.msra.mxu0 0.0
        %537 = vmatprep.subr.mxu0 0.0
        %538 = vmatpush2.msra.mxu0 0.0
        %539 = vmatprep.subr.mxu0 0.0
        %540 = vmatpush2.msra.mxu0 0.0
        %541 = vmatprep.subr.mxu0 0.0
        %542 = vmatpush2.msra.mxu0 0.0
        %543 = vmatprep.subr.mxu0 0.0
        %544 = vmatpush2.msra.mxu0 0.0
        %545 = vmatprep.subr.mxu0 0.0
        %546 = vmatpush2.msra.mxu0 0.0
        %547 = vmatprep.subr.mxu0 0.0
        %548 = vmatpush2.msra.mxu0 0.0
        %549 = vmatprep.subr.mxu0 0.0
        %550 = vmatpush2.msra.mxu0 0.0
        %551 = vmatprep.subr.mxu0 0.0
        %552 = vmatpush2.msra.mxu0 0.0
        %553 = vmatprep.mubr.f32.mxu0 0.0
        %554 = vmatmul.mubr.f32.gmra.mxu0 %v487
        %v555 = vpop.f32.mrf.mxu0
        %v556 = vadd.f32 0.0, %v555
        %v557 = vpop.f32.mrf.mxu0
        %558 = vdwg.mxu0
        %v559 = vmul.f32 %v556, %v482
        %v560 = vld [vmem:[#allocation2] sm:$0xff]
        %v561 = vld [vmem:[%s267] sm:$0xff]
        %v563 = vsel %vm398, %v559, 0
        %565 = vmatprep.subr.mxu0 0.0
        %566 = vmatpush1.msra.mxu0 0.0
        %567 = vmatprep.subr.mxu0 0.0
        %568 = vmatpush1.msra.mxu0 0.0
        %569 = vmatprep.subr.mxu0 0.0
        %570 = vmatpush1.msra.mxu0 0.0
        %571 = vmatprep.subr.mxu0 0.0
        %572 = vmatpush1.msra.mxu0 0.0
        %573 = vmatprep.subr.mxu0 0.0
        %574 = vmatpush1.msra.mxu0 0.0
        %575 = vmatprep.subr.mxu0 0.0
        %576 = vmatpush1.msra.mxu0 0.0
        %577 = vmatprep.subr.mxu0 0.0
        %578 = vmatpush1.msra.mxu0 0.0
        %579 = vmatprep.subr.mxu0 0.0
        %580 = vmatpush1.msra.mxu0 0.0
        %581 = vmatprep.subr.mxu0 0.0
        %582 = vmatpush1.msra.mxu0 0.0
        %583 = vmatprep.subr.mxu0 0.0
        %584 = vmatpush1.msra.mxu0 0.0
        %585 = vmatprep.subr.mxu0 0.0
        %586 = vmatpush1.msra.mxu0 0.0
        %587 = vmatprep.subr.mxu0 0.0
        %588 = vmatpush1.msra.mxu0 0.0
        %589 = vmatprep.subr.mxu0 0.0
        %590 = vmatpush1.msra.mxu0 0.0
        %591 = vmatprep.subr.mxu0 0.0
        %592 = vmatpush1.msra.mxu0 0.0
        %593 = vmatprep.subr.mxu0 0.0
        %594 = vmatpush1.msra.mxu0 0.0
        %595 = vmatprep.subr.mxu0 0.0
        %596 = vmatpush1.msra.mxu0 %v561
        %597 = vmatprep.subr.mxu0 0.0
        %598 = vmatpush2.msra.mxu0 0.0
        %599 = vmatprep.subr.mxu0 0.0
        %600 = vmatpush2.msra.mxu0 0.0
        %601 = vmatprep.subr.mxu0 0.0
        %602 = vmatpush2.msra.mxu0 0.0
        %603 = vmatprep.subr.mxu0 0.0
        %604 = vmatpush2.msra.mxu0 0.0
        %605 = vmatprep.subr.mxu0 0.0
        %606 = vmatpush2.msra.mxu0 0.0
        %607 = vmatprep.subr.mxu0 0.0
        %608 = vmatpush2.msra.mxu0 0.0
        %609 = vmatprep.subr.mxu0 0.0
        %610 = vmatpush2.msra.mxu0 0.0
        %611 = vmatprep.subr.mxu0 0.0
        %612 = vmatpush2.msra.mxu0 0.0
        %613 = vmatprep.subr.mxu0 0.0
        %614 = vmatpush2.msra.mxu0 0.0
        %615 = vmatprep.subr.mxu0 0.0
        %616 = vmatpush2.msra.mxu0 0.0
        %617 = vmatprep.subr.mxu0 0.0
        %618 = vmatpush2.msra.mxu0 0.0
        %619 = vmatprep.subr.mxu0 0.0
        %620 = vmatpush2.msra.mxu0 0.0
        %621 = vmatprep.subr.mxu0 0.0
        %622 = vmatpush2.msra.mxu0 0.0
        %623 = vmatprep.subr.mxu0 0.0
        %624 = vmatpush2.msra.mxu0 0.0
        %625 = vmatprep.subr.mxu0 0.0
        %626 = vmatpush2.msra.mxu0 0.0
        %627 = vmatprep.subr.mxu0 0.0
        %628 = vmatpush2.msra.mxu0 0.0
        %629 = vmatprep.mubr.f32.mxu0 0.0
        %630 = vmatmul.mubr.f32.gmra.mxu0 %v563
        %v631 = vpop.f32.mrf.mxu0
        %v632 = vadd.f32 0.0, %v631
        %v633 = vpop.f32.mrf.mxu0
        %634 = vdwg.mxu0
        %v635 = vadd.f32 %v560, %v632
        %636 = vst.msk [vmem:[#allocation2] sm:$0xff] %vm321, %v635
        %637 = vrot.lane.b32.xlu0 %v392, 104
        %v638 = vpop.permute.xlu0 %637
        %639 = vrot.lane.b32.xlu0 %v392, 96
        %v640 = vpop.permute.xlu0 %639
        %v641 = vsel %vm398, %v638, 0
        %v643 = vsel %vm398, %v640, 0
        %645 = vmatprep.subr.mxu0 0.0
        %646 = vmatpush1.xpose.msra.mxu0 0.0
        %647 = vmatprep.subr.mxu0 0.0
        %648 = vmatpush1.xpose.msra.mxu0 0.0
        %649 = vmatprep.subr.mxu0 0.0
        %650 = vmatpush1.xpose.msra.mxu0 0.0
        %651 = vmatprep.subr.mxu0 0.0
        %652 = vmatpush1.xpose.msra.mxu0 0.0
        %653 = vmatprep.subr.mxu0 0.0
        %654 = vmatpush1.xpose.msra.mxu0 0.0
        %655 = vmatprep.subr.mxu0 0.0
        %656 = vmatpush1.xpose.msra.mxu0 0.0
        %657 = vmatprep.subr.mxu0 0.0
        %658 = vmatpush1.xpose.msra.mxu0 0.0
        %659 = vmatprep.subr.mxu0 0.0
        %660 = vmatpush1.xpose.msra.mxu0 0.0
        %661 = vmatprep.subr.mxu0 0.0
        %662 = vmatpush1.xpose.msra.mxu0 0.0
        %663 = vmatprep.subr.mxu0 0.0
        %664 = vmatpush1.xpose.msra.mxu0 0.0
        %665 = vmatprep.subr.mxu0 0.0
        %666 = vmatpush1.xpose.msra.mxu0 0.0
        %667 = vmatprep.subr.mxu0 0.0
        %668 = vmatpush1.xpose.msra.mxu0 0.0
        %669 = vmatprep.subr.mxu0 0.0
        %670 = vmatpush1.xpose.msra.mxu0 0.0
        %671 = vmatprep.subr.mxu0 0.0
        %672 = vmatpush1.xpose.msra.mxu0 0.0
        %673 = vmatprep.subr.mxu0 0.0
        %674 = vmatpush1.xpose.msra.mxu0 0.0
        %675 = vmatprep.subr.mxu0 0.0
        %676 = vmatpush1.xpose.msra.mxu0 %v643
        %677 = vmatprep.subr.mxu0 0.0
        %678 = vmatpush2.xpose.msra.mxu0 0.0
        %679 = vmatprep.subr.mxu0 0.0
        %680 = vmatpush2.xpose.msra.mxu0 0.0
        %681 = vmatprep.subr.mxu0 0.0
        %682 = vmatpush2.xpose.msra.mxu0 0.0
        %683 = vmatprep.subr.mxu0 0.0
        %684 = vmatpush2.xpose.msra.mxu0 0.0
        %685 = vmatprep.subr.mxu0 0.0
        %686 = vmatpush2.xpose.msra.mxu0 0.0
        %687 = vmatprep.subr.mxu0 0.0
        %688 = vmatpush2.xpose.msra.mxu0 0.0
        %689 = vmatprep.subr.mxu0 0.0
        %690 = vmatpush2.xpose.msra.mxu0 0.0
        %691 = vmatprep.subr.mxu0 0.0
        %692 = vmatpush2.xpose.msra.mxu0 0.0
        %693 = vmatprep.subr.mxu0 0.0
        %694 = vmatpush2.xpose.msra.mxu0 0.0
        %695 = vmatprep.subr.mxu0 0.0
        %696 = vmatpush2.xpose.msra.mxu0 0.0
        %697 = vmatprep.subr.mxu0 0.0
        %698 = vmatpush2.xpose.msra.mxu0 0.0
        %699 = vmatprep.subr.mxu0 0.0
        %700 = vmatpush2.xpose.msra.mxu0 0.0
        %701 = vmatprep.subr.mxu0 0.0
        %702 = vmatpush2.xpose.msra.mxu0 0.0
        %703 = vmatprep.subr.mxu0 0.0
        %704 = vmatpush2.xpose.msra.mxu0 0.0
        %705 = vmatprep.subr.mxu0 0.0
        %706 = vmatpush2.xpose.msra.mxu0 0.0
        %707 = vmatprep.subr.mxu0 0.0
        %708 = vmatpush2.xpose.msra.mxu0 0.0
        %709 = vmatprep.mubr.f32.mxu0 0.0
        %710 = vmatmul.mubr.f32.gmra.mxu0 %v641
        %v711 = vpop.f32.mrf.mxu0
        %v712 = vadd.f32 0.0, %v711
        %v713 = vpop.f32.mrf.mxu0
        %714 = vdwg.mxu0
        %v715 = vsel %vm398, %v712, -inf
        %716 = vmax.xlane.f32.xlu0 %v715
        %v717 = vpop.xlane.xlu0 %716
        %v718 = vsub.f32 %v712, %v717
        %v719 = vmul.f32 %v718, 1.442695
        %v720 = vpow.pop %v719
        %v721 = vsel %vm398, %v720, 0.0
        %722 = vadd.xlane.f32.xlu0 %v721
        %v723 = vpop.xlane.xlu0 %722
        %v724 = vrcp.pop %v723
        %725 = vrot.lane.b32.xlu0 %v392, 88
        %v726 = vpop.permute.xlu0 %725
        %v729 = vsel %vm398, %v720, 0
        %731 = vmatprep.subr.mxu0 0.0
        %732 = vmatpush1.msra.mxu0 0.0
        %733 = vmatprep.subr.mxu0 0.0
        %734 = vmatpush1.msra.mxu0 0.0
        %735 = vmatprep.subr.mxu0 0.0
        %736 = vmatpush1.msra.mxu0 0.0
        %737 = vmatprep.subr.mxu0 0.0
        %738 = vmatpush1.msra.mxu0 0.0
        %739 = vmatprep.subr.mxu0 0.0
        %740 = vmatpush1.msra.mxu0 0.0
        %741 = vmatprep.subr.mxu0 0.0
        %742 = vmatpush1.msra.mxu0 0.0
        %743 = vmatprep.subr.mxu0 0.0
        %744 = vmatpush1.msra.mxu0 0.0
        %745 = vmatprep.subr.mxu0 0.0
        %746 = vmatpush1.msra.mxu0 0.0
        %747 = vmatprep.subr.mxu0 0.0
        %748 = vmatpush1.msra.mxu0 0.0
        %749 = vmatprep.subr.mxu0 0.0
        %750 = vmatpush1.msra.mxu0 0.0
        %751 = vmatprep.subr.mxu0 0.0
        %752 = vmatpush1.msra.mxu0 0.0
        %753 = vmatprep.subr.mxu0 0.0
        %754 = vmatpush1.msra.mxu0 0.0
        %755 = vmatprep.subr.mxu0 0.0
        %756 = vmatpush1.msra.mxu0 0.0
        %757 = vmatprep.subr.mxu0 0.0
        %758 = vmatpush1.msra.mxu0 0.0
        %759 = vmatprep.subr.mxu0 0.0
        %760 = vmatpush1.msra.mxu0 0.0
        %761 = vmatprep.subr.mxu0 0.0
        %762 = vmatpush1.msra.mxu0 %v726
        %763 = vmatprep.subr.mxu0 0.0
        %764 = vmatpush2.msra.mxu0 0.0
        %765 = vmatprep.subr.mxu0 0.0
        %766 = vmatpush2.msra.mxu0 0.0
        %767 = vmatprep.subr.mxu0 0.0
        %768 = vmatpush2.msra.mxu0 0.0
        %769 = vmatprep.subr.mxu0 0.0
        %770 = vmatpush2.msra.mxu0 0.0
        %771 = vmatprep.subr.mxu0 0.0
        %772 = vmatpush2.msra.mxu0 0.0
        %773 = vmatprep.subr.mxu0 0.0
        %774 = vmatpush2.msra.mxu0 0.0
        %775 = vmatprep.subr.mxu0 0.0
        %776 = vmatpush2.msra.mxu0 0.0
        %777 = vmatprep.subr.mxu0 0.0
        %778 = vmatpush2.msra.mxu0 0.0
        %779 = vmatprep.subr.mxu0 0.0
        %780 = vmatpush2.msra.mxu0 0.0
        %781 = vmatprep.subr.mxu0 0.0
        %782 = vmatpush2.msra.mxu0 0.0
        %783 = vmatprep.subr.mxu0 0.0
        %784 = vmatpush2.msra.mxu0 0.0
        %785 = vmatprep.subr.mxu0 0.0
        %786 = vmatpush2.msra.mxu0 0.0
        %787 = vmatprep.subr.mxu0 0.0
        %788 = vmatpush2.msra.mxu0 0.0
        %789 = vmatprep.subr.mxu0 0.0
        %790 = vmatpush2.msra.mxu0 0.0
        %791 = vmatprep.subr.mxu0 0.0
        %792 = vmatpush2.msra.mxu0 0.0
        %793 = vmatprep.subr.mxu0 0.0
        %794 = vmatpush2.msra.mxu0 0.0
        %795 = vmatprep.mubr.f32.mxu0 0.0
        %796 = vmatmul.mubr.f32.gmra.mxu0 %v729
        %v797 = vpop.f32.mrf.mxu0
        %v798 = vadd.f32 0.0, %v797
        %v799 = vpop.f32.mrf.mxu0
        %800 = vdwg.mxu0
        %v801 = vmul.f32 %v798, %v724
        %v802 = vld [vmem:[#allocation2] sm:$0xff]
        %s803 = scalar_lea.vmem %s267, 8 [#allocation8]
        %v804 = vld [vmem:[%s803] sm:$0xff]
        %v806 = vsel %vm398, %v801, 0
        %808 = vmatprep.subr.mxu0 0.0
        %809 = vmatpush1.msra.mxu0 0.0
        %810 = vmatprep.subr.mxu0 0.0
        %811 = vmatpush1.msra.mxu0 0.0
        %812 = vmatprep.subr.mxu0 0.0
        %813 = vmatpush1.msra.mxu0 0.0
        %814 = vmatprep.subr.mxu0 0.0
        %815 = vmatpush1.msra.mxu0 0.0
        %816 = vmatprep.subr.mxu0 0.0
        %817 = vmatpush1.msra.mxu0 0.0
        %818 = vmatprep.subr.mxu0 0.0
        %819 = vmatpush1.msra.mxu0 0.0
        %820 = vmatprep.subr.mxu0 0.0
        %821 = vmatpush1.msra.mxu0 0.0
        %822 = vmatprep.subr.mxu0 0.0
        %823 = vmatpush1.msra.mxu0 0.0
        %824 = vmatprep.subr.mxu0 0.0
        %825 = vmatpush1.msra.mxu0 0.0
        %826 = vmatprep.subr.mxu0 0.0
        %827 = vmatpush1.msra.mxu0 0.0
        %828 = vmatprep.subr.mxu0 0.0
        %829 = vmatpush1.msra.mxu0 0.0
        %830 = vmatprep.subr.mxu0 0.0
        %831 = vmatpush1.msra.mxu0 0.0
        %832 = vmatprep.subr.mxu0 0.0
        %833 = vmatpush1.msra.mxu0 0.0
        %834 = vmatprep.subr.mxu0 0.0
        %835 = vmatpush1.msra.mxu0 0.0
        %836 = vmatprep.subr.mxu0 0.0
        %837 = vmatpush1.msra.mxu0 0.0
        %838 = vmatprep.subr.mxu0 0.0
        %839 = vmatpush1.msra.mxu0 %v804
        %840 = vmatprep.subr.mxu0 0.0
        %841 = vmatpush2.msra.mxu0 0.0
        %842 = vmatprep.subr.mxu0 0.0
        %843 = vmatpush2.msra.mxu0 0.0
        %844 = vmatprep.subr.mxu0 0.0
        %845 = vmatpush2.msra.mxu0 0.0
        %846 = vmatprep.subr.mxu0 0.0
        %847 = vmatpush2.msra.mxu0 0.0
        %848 = vmatprep.subr.mxu0 0.0
        %849 = vmatpush2.msra.mxu0 0.0
        %850 = vmatprep.subr.mxu0 0.0
        %851 = vmatpush2.msra.mxu0 0.0
        %852 = vmatprep.subr.mxu0 0.0
        %853 = vmatpush2.msra.mxu0 0.0
        %854 = vmatprep.subr.mxu0 0.0
        %855 = vmatpush2.msra.mxu0 0.0
        %856 = vmatprep.subr.mxu0 0.0
        %857 = vmatpush2.msra.mxu0 0.0
        %858 = vmatprep.subr.mxu0 0.0
        %859 = vmatpush2.msra.mxu0 0.0
        %860 = vmatprep.subr.mxu0 0.0
        %861 = vmatpush2.msra.mxu0 0.0
        %862 = vmatprep.subr.mxu0 0.0
        %863 = vmatpush2.msra.mxu0 0.0
        %864 = vmatprep.subr.mxu0 0.0
        %865 = vmatpush2.msra.mxu0 0.0
        %866 = vmatprep.subr.mxu0 0.0
        %867 = vmatpush2.msra.mxu0 0.0
        %868 = vmatprep.subr.mxu0 0.0
        %869 = vmatpush2.msra.mxu0 0.0
        %870 = vmatprep.subr.mxu0 0.0
        %871 = vmatpush2.msra.mxu0 0.0
        %872 = vmatprep.mubr.f32.mxu0 0.0
        %873 = vmatmul.mubr.f32.gmra.mxu0 %v806
        %v874 = vpop.f32.mrf.mxu0
        %v875 = vadd.f32 0.0, %v874
        %v876 = vpop.f32.mrf.mxu0
        %877 = vdwg.mxu0
        %v878 = vadd.f32 %v802, %v875
        %879 = vst.msk [vmem:[#allocation2] sm:$0xff] %vm321, %v878
        %p880 = scmp.eq.s32.totalorder %s29, 1
        // Predicated region
        $region53: #{tpu_custom_call.1} parent=35 // pred_check
          %p881 = pneg %p880
        $region54: #{tpu_custom_call.1} parent=35 // pred_check_branch
          %883 = sbr.rel (%p881) target = $region56
        $region55: #{tpu_custom_call.1} parent=35 // pred_region
          %v884 = vld [vmem:[#allocation2] sm:$0xff]
          %885 = vst.msk [vmem:[%s301] sm:$0xff] %vm321, %v884
        $region56: #{tpu_custom_call.1} parent=35 // pred_fallthru
          _
        %s886 = sand.u32 %s143, 1
        %s887 = scalar_lea.sflag [#allocation5], %s886
        %s888 = sand.u32 %s143, 1
        %s889 = smul.addr %s888, 8
        %s890 = scalar_lea.vmem [#allocation9], %s889
        // Predicated region
        $region57: #{tpu_custom_call.1} parent=35 // pred_check
          %p891 = pneg %p153
        $region58: #{tpu_custom_call.1} parent=35 // pred_check_branch
          %893 = sbr.rel (%p891) target = $region60
        $region59: #{tpu_custom_call.1} parent=35 // pred_region
          %s895 = ssub.s32 128, 128
          %896 = vsyncadd %s887, %s895
          %s897 = smul.addr %s28, 128
          %s898 = scalar_lea.hbm %s4, %s897
          %s900 = sshll.u32 %s890, 4
          %s901 = int_to_ptr.vmem [resolvable:$true] %s900
          %903 = dma.vmem_to_hbm [thread:$0]  %s901, 128, %s898, %s887
        $region60: #{tpu_custom_call.1} parent=35 // pred_fallthru
          _
      $region36: #{tpu_custom_call.1} parent=5 // pred_fallthru
        _
      %p904 = scmp.le.s32.totalorder 2, %s19
      // Predicated region
      $region61: #{tpu_custom_call.1} parent=5 // pred_check
        %p905 = pneg %p904
      $region62: #{tpu_custom_call.1} parent=5 // pred_check_branch
        %907 = sbr.rel (%p905) target = $region64
      $region63: #{tpu_custom_call.1} parent=5 // pred_region
        %s908 = ssub.s32 %s19, 2
        // Predicated region
        $region65: #{tpu_custom_call.1} parent=63 // pred_check
          %p909 = pneg %p159
        $region66: #{tpu_custom_call.1} parent=63 // pred_check_branch
          %911 = sbr.rel (%p909) target = $region68
        $region67: #{tpu_custom_call.1} parent=63 // pred_region
          %s912 = sand.u32 %s144, 1
          %s913 = scalar_lea.sflag [#allocation5], %s912
          %s914 = sand.u32 %s144, 1
          %s915 = smul.addr %s914, 8
          %s916 = scalar_lea.vmem [#allocation9], %s915
          %917 = dma.done %s913, 128
        $region68: #{tpu_custom_call.1} parent=63 // pred_fallthru
          _
      $region64: #{tpu_custom_call.1} parent=5 // pred_fallthru
        _
    $region6: #{tpu_custom_call.1} parent=1 // loop_footer
      %s23 = sadd.s32 1, %s19
    $region7: #{tpu_custom_call.1} parent=1 // loop_footer_branch
      %18 = sbr.rel target = $region3
    $region8: #{tpu_custom_call.1} parent=1 // loop_exit
      _
    %918 = vsyncpa [#allocation4], 1
    %s919 = scalar_lea.sflag [#allocation4], 1
    %920 = vsyncpa %s919, 1
    %921 = vsyncpa [#allocation7], 1
    %s922 = scalar_lea.sflag [#allocation7], 1
    %923 = vsyncpa %s922, 1
    %924 = vsyncpa [#allocation5], 1
    %s925 = scalar_lea.sflag [#allocation5], 1
    %926 = vsyncpa %s925, 1

</llo_original>
